<compile_context>
chip_gen: v5e
topology: v5e:2x2
jax: 0.10.0
libtpu: 0.0.40
codegen_flags: <defaults>
</compile_context>

<pallas_src>
import functools

import jax
import jax.numpy as jnp
from jax import lax
from jax.experimental import pallas as pl
from jax.experimental.pallas import tpu as pltpu


def _round_up(x, m):
    return -(-x // m) * m


def _crf_normalizer_kernel(nact_ref, emis_ref, len_ref, start_ref, eend_ref,
                           etrans_ref, out_ref, p_scr, s_scr):
    """Scaled-probability forward recursion for one (batch tile, seq chunk)."""
    bt = pl.program_id(0)           # batch-tile index ("parallel")
    g = pl.program_id(1)            # seq-chunk index (innermost, "arbitrary")
    G = pl.num_programs(1)
    C = emis_ref.shape[0]           # timesteps per chunk (static)

    etrans = etrans_ref[...]        # (Tp, Tp) = exp(trans.T - cmax), zero-padded
    len_row = len_ref[...]          # (1, Bt) int32 sequence lengths
    base = g * C

    def step(j, carry):
        p, s = carry
        emis = emis_ref[j]                                        # (Tp, Bt)
        active = (base + j) < len_row                             # (1, Bt)
        # Off the serial chain: per-step emission scaling (depends only on emis).
        emax = jnp.max(emis, axis=0, keepdims=True)               # (1, Bt)   XLU
        e = jnp.exp(emis - emax)                                  # (Tp, Bt)  EUP
        # Serial chain: matmul -> mul -> max -> recip -> mul (no (Tp,Bt) exp/log).
        z = jnp.dot(etrans, p, preferred_element_type=jnp.float32)  # (Tp, Bt)
        u = z * e
        mu = jnp.maximum(jnp.max(u, axis=0, keepdims=True), jnp.float32(1e-30))
        r = pl.reciprocal(mu, approx=True)
        p_new = u * r
        # Exact regardless of r's accuracy: s absorbs -log(r) for the r actually used.
        s_new = s + emax - jnp.log(r)                             # (1, Bt) side chain
        # Keep the select (NOT an arithmetic blend): p_new may carry exact zeros.
        p = jnp.where(active, p_new, p)
        s = jnp.where(active, s_new, s)
        return p, s

    @pl.when(g == 0)
    def _():
        # alpha_0 = start_transitions + emissions[0]  (mask[0] is all-on by contract)
        a0 = start_ref[...] + emis_ref[0]                         # (Tp, Bt)
        s0 = jnp.max(a0, axis=0, keepdims=True)                   # (1, Bt)
        p0 = jnp.exp(a0 - s0)                                     # padded tags -> 0
        p, s = lax.fori_loop(1, C, step, (p0, s0), unroll=True)
        p_scr[...] = p
        s_scr[...] = s

    @pl.when(jnp.logical_and(g > 0, g < nact_ref[bt]))
    def _():
        # Chunks at g >= nact are fully masked for every lane in this tile -> skipped.
        p, s = lax.fori_loop(0, C, step, (p_scr[...], s_scr[...]), unroll=True)
        p_scr[...] = p
        s_scr[...] = s

    @pl.when(g == G - 1)
    def _():
        # logsumexp(alpha + end) = s + log(sum_c p[c] * exp(end[c] - end_max)) + end_max
        zf = jnp.sum(p_scr[...] * eend_ref[...], axis=0, keepdims=True)   # (1, Bt)
        out_ref[...] = s_scr[...] + jnp.log(zf)


def _crf_normalizer(emissions, lengths, start, end, trans, *, chunk=32):
    """log Z per batch element via the Pallas forward-algorithm kernel."""
    S, B, T = emissions.shape
    f32 = jnp.float32

    T_pad = _round_up(max(T, 8), 8)

    # batch_tile: widen up to 512 lanes when batch is big, but keep >= 2 tiles
    # whenever the batch allows so v7x's two TensorCores both get work.
    B128 = _round_up(B, 128)
    cap = 512 if T_pad <= 8 else (256 if T_pad <= 16 else 128)
    batch_tile = 128
    while batch_tile * 2 <= cap and B128 >= batch_tile * 4:
        batch_tile *= 2
    B_pad = _round_up(B, batch_tile)
    n_bt = B_pad // batch_tile

    # chunk of timesteps per grid step; cap per-buffer block bytes (~4 MiB) for v7x VMEM.
    chunk = max(1, min(chunk, S))
    while chunk > 1 and chunk * T_pad * batch_tile * 4 > (4 << 20):
        chunk //= 2
    S_pad = _round_up(S, chunk)
    G = S_pad // chunk

    cmax = jnp.max(trans).astype(f32)
    end_max = jnp.max(end).astype(f32)

    # exp(trans.T - cmax), zero-padded so padded tags never contribute.
    etrans = jnp.zeros((T_pad, T_pad), f32).at[:T, :T].set(
        jnp.exp(trans.astype(f32).T - cmax))
    NEG = jnp.float32(-1e9)                                       # padded tags never win
    start_pad = jnp.full((T_pad, 1), NEG, f32).at[:T, 0].set(start.astype(f32))
    eend_pad = jnp.zeros((T_pad, 1), f32).at[:T, 0].set(
        jnp.exp(end.astype(f32) - end_max))

    # Lane-dense (S, T, B) emissions layout: one fused transpose+pad pass (no cmax
    # shift pass and no mask tensor anymore).
    # TODO(synk): for very large emissions, feed the natural (S,B,T) layout and do the
    # per-chunk (Bt,T)->(T,Bt) transpose in-kernel on the XLU to drop this HBM pass.
    em_t = jnp.swapaxes(emissions.astype(f32), 1, 2)              # (S, T, B)
    em_pad = jnp.zeros((S_pad, T_pad, B_pad), f32).at[:S, :T, :B].set(em_t)

    # Per-lane lengths (resident VMEM row) + per-tile active-chunk count (SMEM prefetch).
    len_pad = jnp.ones((1, B_pad), jnp.int32).at[0, :B].set(lengths)
    max_len_tile = jnp.max(len_pad.reshape(n_bt, batch_tile), axis=1)
    nact = jnp.clip((max_len_tile + chunk - 1) // chunk, 1, G).astype(jnp.int32)

    # VMEM budget: double-buffered emissions blocks + resident constants/state.
    blk_bytes = 4 * chunk * T_pad * batch_tile
    fixed_bytes = 4 * (T_pad * T_pad + 2 * T_pad * 128 + 16 * batch_tile)
    vmem_limit = int(min(max(4 * blk_bytes + fixed_bytes + (2 << 20), 16 << 20),
                         32 << 20))

    out = pl.pallas_call(
        _crf_normalizer_kernel,
        out_shape=jax.ShapeDtypeStruct((1, B_pad), f32),
        grid_spec=pltpu.PrefetchScalarGridSpec(
            num_scalar_prefetch=1,
            grid=(n_bt, G),
            in_specs=[
                # clamp the chunk index to the last active chunk of this tile so
                # skipped chunks re-use the resident block (no DMA).
                pl.BlockSpec((chunk, T_pad, batch_tile),
                             lambda bt, g, nact: (jnp.minimum(g, nact[bt] - 1), 0, bt)),
                pl.BlockSpec((1, batch_tile), lambda bt, g, nact: (0, bt)),
                pl.BlockSpec((T_pad, 1), lambda bt, g, nact: (0, 0)),
                pl.BlockSpec((T_pad, 1), lambda bt, g, nact: (0, 0)),
                pl.BlockSpec((T_pad, T_pad), lambda bt, g, nact: (0, 0)),
            ],
            out_specs=pl.BlockSpec((1, batch_tile), lambda bt, g, nact: (0, bt)),
            scratch_shapes=[pltpu.VMEM((T_pad, batch_tile), f32),   # p (scaled probs)
                            pltpu.VMEM((1, batch_tile), f32)],      # s (log scale)
        ),
        compiler_params=pltpu.CompilerParams(
            dimension_semantics=("parallel", "arbitrary"),
            vmem_limit_bytes=vmem_limit),
        cost_estimate=pl.CostEstimate(
            flops=2 * S * B * T * T,
            transcendentals=2 * S * B * T,
            bytes_accessed=4 * (S_pad * T_pad * B_pad + T_pad * T_pad + 4 * B_pad)),
    )(nact, em_pad, len_pad, start_pad, eend_pad, etrans)

    # Undo the scale offsets folded out of the kernel: -cmax per applied transition
    # (length-1 of them) and -end_max once.  This replaces the old wrapper-side full
    # HBM pass that added cmax to emissions.
    return out[0, :B] + end_max + (lengths.astype(f32) - 1.0) * cmax


@functools.partial(jax.jit, static_argnames=("reduction",))
def crf_log_likelihood(emissions, tags, mask, start, end, trans, reduction="sum"):
    """CRF.forward (time-major inputs): numerator in plain JAX, normalizer in Pallas."""
    S, B, T = emissions.shape
    emissions = emissions.astype(jnp.float32)
    mask_f = mask.astype(jnp.float32)
    tags = tags.astype(jnp.int32)
    start = start.astype(jnp.float32)
    end = end.astype(jnp.float32)
    trans = trans.astype(jnp.float32)

    ar = jnp.arange(B)
    lengths = jnp.sum(mask_f, axis=0).astype(jnp.int32)

    # ---- numerator (gold-path score): trivial vectorized gathers, left to XLA
    e_sel = jnp.take_along_axis(emissions, tags[:, :, None], axis=2)[:, :, 0]   # (S, B)
    num = start[tags[0]] + e_sel[0]
    if S > 1:
        t_sel = trans[tags[:-1], tags[1:]]                                      # (S-1, B)
        num = num + jnp.sum((t_sel + e_sel[1:]) * mask_f[1:], axis=0)
    last_tags = tags[lengths - 1, ar]
    num = num + end[last_tags]

    # ---- normalizer (serial recursion): Pallas kernel
    denom = _crf_normalizer(emissions, lengths, start, end, trans)

    llh = num - denom
    if reduction == "none":
        return llh
    if reduction == "sum":
        return jnp.sum(llh)
    if reduction == "mean":
        return jnp.mean(llh)
    assert reduction == "token_mean"
    return jnp.sum(llh) / jnp.sum(mask_f)


def crf_log_likelihood_ref(emissions, tags, mask, start, end, trans):
    """Pure-JAX reference mirroring the PyTorch module (reduction='none')."""
    S, B, T = emissions.shape
    mask_f = mask.astype(jnp.float32)
    ar = jnp.arange(B)
    # numerator
    score = start[tags[0]] + emissions[0, ar, tags[0]]
    for i in range(1, S):
        mi = mask_f[i]
        score = score + trans[tags[i - 1], tags[i]] * mi + emissions[i, ar, tags[i]] * mi
    seq_ends = mask_f.sum(0).astype(jnp.int32) - 1
    last_tags = tags[seq_ends, ar]
    score = score + end[last_tags]
    # normalizer
    alpha = start[None, :] + emissions[0]
    for i in range(1, S):
        nxt = jax.scipy.special.logsumexp(
            alpha[:, :, None] + trans[None, :, :] + emissions[i][:, None, :], axis=1)
        alpha = jnp.where(mask_f[i][:, None] > 0.5, nxt, alpha)
    denom = jax.scipy.special.logsumexp(alpha + end[None, :], axis=1)
    return score - denom


# TODO(synk): CRF.decode (_viterbi_decode) uses host-side Python-list backtracking; not ported.

if __name__ == "__main__":
    S, B, T = 6, 4, 8  # seq_len, batch, num_tags

    key = jax.random.PRNGKey(0)
    k_emis, k_tags, k_start, k_end, k_trans = jax.random.split(key, 5)

    # deterministic "module parameters": uniform(-0.1, 0.1), as in reset_parameters()
    start = jax.random.uniform(k_start, (T,), minval=-0.1, maxval=0.1, dtype=jnp.float32)
    end = jax.random.uniform(k_end, (T,), minval=-0.1, maxval=0.1, dtype=jnp.float32)
    trans = jax.random.uniform(k_trans, (T, T), minval=-0.1, maxval=0.1, dtype=jnp.float32)

    emissions = jax.random.normal(k_emis, (S, B, T), dtype=jnp.float32)
    tags = jax.random.randint(k_tags, (S, B), 0, T, dtype=jnp.int32)
    lengths = jnp.array([6, 4, 5, 3], dtype=jnp.int32)            # mask[0] all on
    mask = jnp.arange(S)[:, None] < lengths[None, :]              # (S, B) bool, left-contiguous

    llh_none = crf_log_likelihood(emissions, tags, mask, start, end, trans, reduction="none")
    llh_sum = crf_log_likelihood(emissions, tags, mask, start, end, trans, reduction="sum")
    jax.block_until_ready(llh_none)
    jax.block_until_ready(llh_sum)

    ref_none = crf_log_likelihood_ref(emissions, tags, mask, start, end, trans)
    assert jnp.allclose(llh_none, ref_none, atol=1e-4, rtol=1e-4), (llh_none, ref_none)
    assert jnp.allclose(llh_sum, jnp.sum(ref_none), atol=1e-4, rtol=1e-4)

    print("KERNEL_OK")
</pallas_src>

<mosaic_0001>
module attributes {stable_mosaic.version = 11 : i64} {
  func.func @_crf_normalizer_kernel(%arg0: i32, %arg1: i32, %arg2: memref<1xi32, #tpu.memory_space<smem>>, %arg3: memref<6x8x128xf32, #tpu.memory_space<vmem>>, %arg4: memref<1x128xi32, #tpu.memory_space<vmem>>, %arg5: memref<8x1xf32, #tpu.memory_space<vmem>>, %arg6: memref<8x1xf32, #tpu.memory_space<vmem>>, %arg7: memref<8x8xf32, #tpu.memory_space<vmem>>, %arg8: memref<1x128xf32, #tpu.memory_space<vmem>>, %arg9: memref<8x128xf32, #tpu.memory_space<vmem>>, %arg10: memref<1x128xf32, #tpu.memory_space<vmem>>) attributes {dimension_semantics = [#tpu.dimension_semantics<parallel>, #tpu.dimension_semantics<arbitrary>], iteration_bounds = array<i64: 1, 1>, scalar_prefetch = 1 : i64, scratch_operands = 2 : i64, tpu.core_type = #tpu.core_type<tc>, window_params = [{transform_indices = @transform_0, window_bounds = array<i64: 6, 8, 128>}, {transform_indices = @transform_1, window_bounds = array<i64: 1, 128>}, {pipeline_mode = #tpu.pipeline_mode<synchronous>, transform_indices = @transform_2, window_bounds = array<i64: 8, 1>}, {pipeline_mode = #tpu.pipeline_mode<synchronous>, transform_indices = @transform_3, window_bounds = array<i64: 8, 1>}, {pipeline_mode = #tpu.pipeline_mode<synchronous>, transform_indices = @transform_4, window_bounds = array<i64: 8, 8>}, {transform_indices = @transform_5, window_bounds = array<i64: 1, 128>}]} {
    %c0 = arith.constant 0 : index
    %c0_0 = arith.constant 0 : index
    %0 = vector.load %arg7[%c0, %c0_0] : memref<8x8xf32, #tpu.memory_space<vmem>>, vector<8x8xf32>
    %c0_1 = arith.constant 0 : index
    %c0_2 = arith.constant 0 : index
    %1 = vector.load %arg4[%c0_1, %c0_2] : memref<1x128xi32, #tpu.memory_space<vmem>>, vector<1x128xi32>
    %c6_i32 = arith.constant 6 : i32
    %2 = arith.muli %arg1, %c6_i32 : i32
    %c0_i32 = arith.constant 0 : i32
    %3 = arith.cmpi eq, %arg1, %c0_i32 : i32
    %4 = arith.extui %3 : i1 to i32
    %c0_i32_3 = arith.constant 0 : i32
    %5 = arith.cmpi ne, %4, %c0_i32_3 : i32
    scf.if %5 {
      %c0_8 = arith.constant 0 : index
      %c0_9 = arith.constant 0 : index
      %16 = vector.load %arg5[%c0_8, %c0_9] : memref<8x1xf32, #tpu.memory_space<vmem>>, vector<8x1xf32>
      %c0_10 = arith.constant 0 : index
      %c0_11 = arith.constant 0 : index
      %c0_12 = arith.constant 0 : index
      %17 = vector.load %arg3[%c0_10, %c0_11, %c0_12] : memref<6x8x128xf32, #tpu.memory_space<vmem>>, vector<1x8x128xf32>
      %18 = vector.shape_cast %17 : vector<1x8x128xf32> to vector<8x128xf32>
      %19 = vector.broadcast %16 : vector<8x1xf32> to vector<8x128xf32>
      %20 = arith.addf %19, %18 : vector<8x128xf32>
      %cst = arith.constant dense<0xFF800000> : vector<128xf32>
      %21 = vector.multi_reduction <maximumf>, %20, %cst [0] : vector<8x128xf32> to vector<128xf32>
      %22 = vector.shape_cast %21 : vector<128xf32> to vector<1x128xf32>
      %23 = vector.broadcast %22 : vector<1x128xf32> to vector<8x128xf32>
      %24 = arith.subf %20, %23 : vector<8x128xf32>
      %25 = math.exp %24 : vector<8x128xf32>
      %c1_i32 = arith.constant 1 : i32
      %26 = arith.index_cast %c1_i32 : i32 to index
      %c0_13 = arith.constant 0 : index
      %c0_14 = arith.constant 0 : index
      %27 = vector.load %arg3[%26, %c0_13, %c0_14] : memref<6x8x128xf32, #tpu.memory_space<vmem>>, vector<1x8x128xf32>
      %28 = vector.shape_cast %27 : vector<1x8x128xf32> to vector<8x128xf32>
      %29 = arith.addi %2, %c1_i32 : i32
      %30 = vector.broadcast %29 : i32 to vector<1x128xi32>
      %31 = arith.cmpi slt, %30, %1 : vector<1x128xi32>
      %cst_15 = arith.constant dense<0xFF800000> : vector<128xf32>
      %32 = vector.multi_reduction <maximumf>, %28, %cst_15 [0] : vector<8x128xf32> to vector<128xf32>
      %33 = vector.shape_cast %32 : vector<128xf32> to vector<1x128xf32>
      %34 = vector.broadcast %33 : vector<1x128xf32> to vector<8x128xf32>
      %35 = arith.subf %28, %34 : vector<8x128xf32>
      %36 = math.exp %35 : vector<8x128xf32>
      %cst_16 = arith.constant dense<0.000000e+00> : vector<8x128xf32>
      %37 = tpu.matmul %0, %25, %cst_16 {dimension_numbers = #tpu.dot_dimension_numbers<[1], [0], [0], [1], [0, 0, 1, 1], [], []>} : vector<8x8xf32>, vector<8x128xf32>, vector<8x128xf32> -> vector<8x128xf32>
      %38 = arith.mulf %37, %36 : vector<8x128xf32>
      %cst_17 = arith.constant dense<0xFF800000> : vector<128xf32>
      %39 = vector.multi_reduction <maximumf>, %38, %cst_17 [0] : vector<8x128xf32> to vector<128xf32>
      %40 = vector.shape_cast %39 : vector<128xf32> to vector<1x128xf32>
      %cst_18 = arith.constant 1.000000e-30 : f32
      %41 = vector.broadcast %cst_18 : f32 to vector<1x128xf32>
      %42 = arith.maximumf %40, %41 : vector<1x128xf32>
      %43 = tpu.reciprocal %42 {approx = true} : vector<1x128xf32> -> vector<1x128xf32>
      %44 = vector.broadcast %43 : vector<1x128xf32> to vector<8x128xf32>
      %45 = arith.mulf %38, %44 : vector<8x128xf32>
      %46 = arith.addf %22, %33 : vector<1x128xf32>
      %47 = math.log %43 : vector<1x128xf32>
      %48 = arith.subf %46, %47 : vector<1x128xf32>
      %49 = vector.shape_cast %31 : vector<1x128xi1> to vector<1x128xi1>
      %50 = vector.broadcast %49 : vector<1x128xi1> to vector<8x128xi1>
      %51 = arith.select %50, %45, %25 : vector<8x128xi1>, vector<8x128xf32>
      %52 = arith.select %31, %48, %22 : vector<1x128xi1>, vector<1x128xf32>
      %c2_i32 = arith.constant 2 : i32
      %53 = arith.index_cast %c2_i32 : i32 to index
      %c0_19 = arith.constant 0 : index
      %c0_20 = arith.constant 0 : index
      %54 = vector.load %arg3[%53, %c0_19, %c0_20] : memref<6x8x128xf32, #tpu.memory_space<vmem>>, vector<1x8x128xf32>
      %55 = vector.shape_cast %54 : vector<1x8x128xf32> to vector<8x128xf32>
      %56 = arith.addi %2, %c2_i32 : i32
      %57 = vector.broadcast %56 : i32 to vector<1x128xi32>
      %58 = arith.cmpi slt, %57, %1 : vector<1x128xi32>
      %cst_21 = arith.constant dense<0xFF800000> : vector<128xf32>
      %59 = vector.multi_reduction <maximumf>, %55, %cst_21 [0] : vector<8x128xf32> to vector<128xf32>
      %60 = vector.shape_cast %59 : vector<128xf32> to vector<1x128xf32>
      %61 = vector.broadcast %60 : vector<1x128xf32> to vector<8x128xf32>
      %62 = arith.subf %55, %61 : vector<8x128xf32>
      %63 = math.exp %62 : vector<8x128xf32>
      %cst_22 = arith.constant dense<0.000000e+00> : vector<8x128xf32>
      %64 = tpu.matmul %0, %51, %cst_22 {dimension_numbers = #tpu.dot_dimension_numbers<[1], [0], [0], [1], [0, 0, 1, 1], [], []>} : vector<8x8xf32>, vector<8x128xf32>, vector<8x128xf32> -> vector<8x128xf32>
      %65 = arith.mulf %64, %63 : vector<8x128xf32>
      %cst_23 = arith.constant dense<0xFF800000> : vector<128xf32>
      %66 = vector.multi_reduction <maximumf>, %65, %cst_23 [0] : vector<8x128xf32> to vector<128xf32>
      %67 = vector.shape_cast %66 : vector<128xf32> to vector<1x128xf32>
      %cst_24 = arith.constant 1.000000e-30 : f32
      %68 = vector.broadcast %cst_24 : f32 to vector<1x128xf32>
      %69 = arith.maximumf %67, %68 : vector<1x128xf32>
      %70 = tpu.reciprocal %69 {approx = true} : vector<1x128xf32> -> vector<1x128xf32>
      %71 = vector.broadcast %70 : vector<1x128xf32> to vector<8x128xf32>
      %72 = arith.mulf %65, %71 : vector<8x128xf32>
      %73 = arith.addf %52, %60 : vector<1x128xf32>
      %74 = math.log %70 : vector<1x128xf32>
      %75 = arith.subf %73, %74 : vector<1x128xf32>
      %76 = vector.shape_cast %58 : vector<1x128xi1> to vector<1x128xi1>
      %77 = vector.broadcast %76 : vector<1x128xi1> to vector<8x128xi1>
      %78 = arith.select %77, %72, %51 : vector<8x128xi1>, vector<8x128xf32>
      %79 = arith.select %58, %75, %52 : vector<1x128xi1>, vector<1x128xf32>
      %c3_i32 = arith.constant 3 : i32
      %80 = arith.index_cast %c3_i32 : i32 to index
      %c0_25 = arith.constant 0 : index
      %c0_26 = arith.constant 0 : index
      %81 = vector.load %arg3[%80, %c0_25, %c0_26] : memref<6x8x128xf32, #tpu.memory_space<vmem>>, vector<1x8x128xf32>
      %82 = vector.shape_cast %81 : vector<1x8x128xf32> to vector<8x128xf32>
      %83 = arith.addi %2, %c3_i32 : i32
      %84 = vector.broadcast %83 : i32 to vector<1x128xi32>
      %85 = arith.cmpi slt, %84, %1 : vector<1x128xi32>
      %cst_27 = arith.constant dense<0xFF800000> : vector<128xf32>
      %86 = vector.multi_reduction <maximumf>, %82, %cst_27 [0] : vector<8x128xf32> to vector<128xf32>
      %87 = vector.shape_cast %86 : vector<128xf32> to vector<1x128xf32>
      %88 = vector.broadcast %87 : vector<1x128xf32> to vector<8x128xf32>
      %89 = arith.subf %82, %88 : vector<8x128xf32>
      %90 = math.exp %89 : vector<8x128xf32>
      %cst_28 = arith.constant dense<0.000000e+00> : vector<8x128xf32>
      %91 = tpu.matmul %0, %78, %cst_28 {dimension_numbers = #tpu.dot_dimension_numbers<[1], [0], [0], [1], [0, 0, 1, 1], [], []>} : vector<8x8xf32>, vector<8x128xf32>, vector<8x128xf32> -> vector<8x128xf32>
      %92 = arith.mulf %91, %90 : vector<8x128xf32>
      %cst_29 = arith.constant dense<0xFF800000> : vector<128xf32>
      %93 = vector.multi_reduction <maximumf>, %92, %cst_29 [0] : vector<8x128xf32> to vector<128xf32>
      %94 = vector.shape_cast %93 : vector<128xf32> to vector<1x128xf32>
      %cst_30 = arith.constant 1.000000e-30 : f32
      %95 = vector.broadcast %cst_30 : f32 to vector<1x128xf32>
      %96 = arith.maximumf %94, %95 : vector<1x128xf32>
      %97 = tpu.reciprocal %96 {approx = true} : vector<1x128xf32> -> vector<1x128xf32>
      %98 = vector.broadcast %97 : vector<1x128xf32> to vector<8x128xf32>
      %99 = arith.mulf %92, %98 : vector<8x128xf32>
      %100 = arith.addf %79, %87 : vector<1x128xf32>
      %101 = math.log %97 : vector<1x128xf32>
      %102 = arith.subf %100, %101 : vector<1x128xf32>
      %103 = vector.shape_cast %85 : vector<1x128xi1> to vector<1x128xi1>
      %104 = vector.broadcast %103 : vector<1x128xi1> to vector<8x128xi1>
      %105 = arith.select %104, %99, %78 : vector<8x128xi1>, vector<8x128xf32>
      %106 = arith.select %85, %102, %79 : vector<1x128xi1>, vector<1x128xf32>
      %c4_i32 = arith.constant 4 : i32
      %107 = arith.index_cast %c4_i32 : i32 to index
      %c0_31 = arith.constant 0 : index
      %c0_32 = arith.constant 0 : index
      %108 = vector.load %arg3[%107, %c0_31, %c0_32] : memref<6x8x128xf32, #tpu.memory_space<vmem>>, vector<1x8x128xf32>
      %109 = vector.shape_cast %108 : vector<1x8x128xf32> to vector<8x128xf32>
      %110 = arith.addi %2, %c4_i32 : i32
      %111 = vector.broadcast %110 : i32 to vector<1x128xi32>
      %112 = arith.cmpi slt, %111, %1 : vector<1x128xi32>
      %cst_33 = arith.constant dense<0xFF800000> : vector<128xf32>
      %113 = vector.multi_reduction <maximumf>, %109, %cst_33 [0] : vector<8x128xf32> to vector<128xf32>
      %114 = vector.shape_cast %113 : vector<128xf32> to vector<1x128xf32>
      %115 = vector.broadcast %114 : vector<1x128xf32> to vector<8x128xf32>
      %116 = arith.subf %109, %115 : vector<8x128xf32>
      %117 = math.exp %116 : vector<8x128xf32>
      %cst_34 = arith.constant dense<0.000000e+00> : vector<8x128xf32>
      %118 = tpu.matmul %0, %105, %cst_34 {dimension_numbers = #tpu.dot_dimension_numbers<[1], [0], [0], [1], [0, 0, 1, 1], [], []>} : vector<8x8xf32>, vector<8x128xf32>, vector<8x128xf32> -> vector<8x128xf32>
      %119 = arith.mulf %118, %117 : vector<8x128xf32>
      %cst_35 = arith.constant dense<0xFF800000> : vector<128xf32>
      %120 = vector.multi_reduction <maximumf>, %119, %cst_35 [0] : vector<8x128xf32> to vector<128xf32>
      %121 = vector.shape_cast %120 : vector<128xf32> to vector<1x128xf32>
      %cst_36 = arith.constant 1.000000e-30 : f32
      %122 = vector.broadcast %cst_36 : f32 to vector<1x128xf32>
      %123 = arith.maximumf %121, %122 : vector<1x128xf32>
      %124 = tpu.reciprocal %123 {approx = true} : vector<1x128xf32> -> vector<1x128xf32>
      %125 = vector.broadcast %124 : vector<1x128xf32> to vector<8x128xf32>
      %126 = arith.mulf %119, %125 : vector<8x128xf32>
      %127 = arith.addf %106, %114 : vector<1x128xf32>
      %128 = math.log %124 : vector<1x128xf32>
      %129 = arith.subf %127, %128 : vector<1x128xf32>
      %130 = vector.shape_cast %112 : vector<1x128xi1> to vector<1x128xi1>
      %131 = vector.broadcast %130 : vector<1x128xi1> to vector<8x128xi1>
      %132 = arith.select %131, %126, %105 : vector<8x128xi1>, vector<8x128xf32>
      %133 = arith.select %112, %129, %106 : vector<1x128xi1>, vector<1x128xf32>
      %c5_i32 = arith.constant 5 : i32
      %134 = arith.index_cast %c5_i32 : i32 to index
      %c0_37 = arith.constant 0 : index
      %c0_38 = arith.constant 0 : index
      %135 = vector.load %arg3[%134, %c0_37, %c0_38] : memref<6x8x128xf32, #tpu.memory_space<vmem>>, vector<1x8x128xf32>
      %136 = vector.shape_cast %135 : vector<1x8x128xf32> to vector<8x128xf32>
      %137 = arith.addi %2, %c5_i32 : i32
      %138 = vector.broadcast %137 : i32 to vector<1x128xi32>
      %139 = arith.cmpi slt, %138, %1 : vector<1x128xi32>
      %cst_39 = arith.constant dense<0xFF800000> : vector<128xf32>
      %140 = vector.multi_reduction <maximumf>, %136, %cst_39 [0] : vector<8x128xf32> to vector<128xf32>
      %141 = vector.shape_cast %140 : vector<128xf32> to vector<1x128xf32>
      %142 = vector.broadcast %141 : vector<1x128xf32> to vector<8x128xf32>
      %143 = arith.subf %136, %142 : vector<8x128xf32>
      %144 = math.exp %143 : vector<8x128xf32>
      %cst_40 = arith.constant dense<0.000000e+00> : vector<8x128xf32>
      %145 = tpu.matmul %0, %132, %cst_40 {dimension_numbers = #tpu.dot_dimension_numbers<[1], [0], [0], [1], [0, 0, 1, 1], [], []>} : vector<8x8xf32>, vector<8x128xf32>, vector<8x128xf32> -> vector<8x128xf32>
      %146 = arith.mulf %145, %144 : vector<8x128xf32>
      %cst_41 = arith.constant dense<0xFF800000> : vector<128xf32>
      %147 = vector.multi_reduction <maximumf>, %146, %cst_41 [0] : vector<8x128xf32> to vector<128xf32>
      %148 = vector.shape_cast %147 : vector<128xf32> to vector<1x128xf32>
      %cst_42 = arith.constant 1.000000e-30 : f32
      %149 = vector.broadcast %cst_42 : f32 to vector<1x128xf32>
      %150 = arith.maximumf %148, %149 : vector<1x128xf32>
      %151 = tpu.reciprocal %150 {approx = true} : vector<1x128xf32> -> vector<1x128xf32>
      %152 = vector.broadcast %151 : vector<1x128xf32> to vector<8x128xf32>
      %153 = arith.mulf %146, %152 : vector<8x128xf32>
      %154 = arith.addf %133, %141 : vector<1x128xf32>
      %155 = math.log %151 : vector<1x128xf32>
      %156 = arith.subf %154, %155 : vector<1x128xf32>
      %157 = vector.shape_cast %139 : vector<1x128xi1> to vector<1x128xi1>
      %158 = vector.broadcast %157 : vector<1x128xi1> to vector<8x128xi1>
      %159 = arith.select %158, %153, %132 : vector<8x128xi1>, vector<8x128xf32>
      %160 = arith.select %139, %156, %133 : vector<1x128xi1>, vector<1x128xf32>
      %c5_i32_43 = arith.constant 5 : i32
      %c0_44 = arith.constant 0 : index
      %c0_45 = arith.constant 0 : index
      %161 = vector.load %arg9[%c0_44, %c0_45] : memref<8x128xf32, #tpu.memory_space<vmem>>, vector<8x128xf32>
      tpu.vector_store %arg9[%c0_44, %c0_45], %159 {strides = array<i32>} : memref<8x128xf32, #tpu.memory_space<vmem>>, vector<8x128xf32>,
      %c0_46 = arith.constant 0 : index
      %c0_47 = arith.constant 0 : index
      %162 = vector.load %arg10[%c0_46, %c0_47] : memref<1x128xf32, #tpu.memory_space<vmem>>, vector<1x128xf32>
      tpu.vector_store %arg10[%c0_46, %c0_47], %160 {strides = array<i32>} : memref<1x128xf32, #tpu.memory_space<vmem>>, vector<1x128xf32>,
    } else {
    }
    %c0_i32_4 = arith.constant 0 : i32
    %6 = arith.cmpi sgt, %arg1, %c0_i32_4 : i32
    %7 = arith.index_cast %arg0 : i32 to index
    %8 = memref.load %arg2[%7] : memref<1xi32, #tpu.memory_space<smem>>
    %9 = arith.cmpi slt, %arg1, %8 : i32
    %10 = arith.andi %6, %9 : i1
    %11 = arith.extui %10 : i1 to i32
    %c0_i32_5 = arith.constant 0 : i32
    %12 = arith.cmpi ne, %11, %c0_i32_5 : i32
    scf.if %12 {
      %c0_8 = arith.constant 0 : index
      %c0_9 = arith.constant 0 : index
      %16 = vector.load %arg9[%c0_8, %c0_9] : memref<8x128xf32, #tpu.memory_space<vmem>>, vector<8x128xf32>
      %c0_10 = arith.constant 0 : index
      %c0_11 = arith.constant 0 : index
      %17 = vector.load %arg10[%c0_10, %c0_11] : memref<1x128xf32, #tpu.memory_space<vmem>>, vector<1x128xf32>
      %c0_i32_12 = arith.constant 0 : i32
      %18 = arith.index_cast %c0_i32_12 : i32 to index
      %c0_13 = arith.constant 0 : index
      %c0_14 = arith.constant 0 : index
      %19 = vector.load %arg3[%18, %c0_13, %c0_14] : memref<6x8x128xf32, #tpu.memory_space<vmem>>, vector<1x8x128xf32>
      %20 = vector.shape_cast %19 : vector<1x8x128xf32> to vector<8x128xf32>
      %21 = arith.addi %2, %c0_i32_12 : i32
      %22 = vector.broadcast %21 : i32 to vector<1x128xi32>
      %23 = arith.cmpi slt, %22, %1 : vector<1x128xi32>
      %cst = arith.constant dense<0xFF800000> : vector<128xf32>
      %24 = vector.multi_reduction <maximumf>, %20, %cst [0] : vector<8x128xf32> to vector<128xf32>
      %25 = vector.shape_cast %24 : vector<128xf32> to vector<1x128xf32>
      %26 = vector.broadcast %25 : vector<1x128xf32> to vector<8x128xf32>
      %27 = arith.subf %20, %26 : vector<8x128xf32>
      %28 = math.exp %27 : vector<8x128xf32>
      %cst_15 = arith.constant dense<0.000000e+00> : vector<8x128xf32>
      %29 = tpu.matmul %0, %16, %cst_15 {dimension_numbers = #tpu.dot_dimension_numbers<[1], [0], [0], [1], [0, 0, 1, 1], [], []>} : vector<8x8xf32>, vector<8x128xf32>, vector<8x128xf32> -> vector<8x128xf32>
      %30 = arith.mulf %29, %28 : vector<8x128xf32>
      %cst_16 = arith.constant dense<0xFF800000> : vector<128xf32>
      %31 = vector.multi_reduction <maximumf>, %30, %cst_16 [0] : vector<8x128xf32> to vector<128xf32>
      %32 = vector.shape_cast %31 : vector<128xf32> to vector<1x128xf32>
      %cst_17 = arith.constant 1.000000e-30 : f32
      %33 = vector.broadcast %cst_17 : f32 to vector<1x128xf32>
      %34 = arith.maximumf %32, %33 : vector<1x128xf32>
      %35 = tpu.reciprocal %34 {approx = true} : vector<1x128xf32> -> vector<1x128xf32>
      %36 = vector.broadcast %35 : vector<1x128xf32> to vector<8x128xf32>
      %37 = arith.mulf %30, %36 : vector<8x128xf32>
      %38 = arith.addf %17, %25 : vector<1x128xf32>
      %39 = math.log %35 : vector<1x128xf32>
      %40 = arith.subf %38, %39 : vector<1x128xf32>
      %41 = vector.shape_cast %23 : vector<1x128xi1> to vector<1x128xi1>
      %42 = vector.broadcast %41 : vector<1x128xi1> to vector<8x128xi1>
      %43 = arith.select %42, %37, %16 : vector<8x128xi1>, vector<8x128xf32>
      %44 = arith.select %23, %40, %17 : vector<1x128xi1>, vector<1x128xf32>
      %c1_i32 = arith.constant 1 : i32
      %45 = arith.index_cast %c1_i32 : i32 to index
      %c0_18 = arith.constant 0 : index
      %c0_19 = arith.constant 0 : index
      %46 = vector.load %arg3[%45, %c0_18, %c0_19] : memref<6x8x128xf32, #tpu.memory_space<vmem>>, vector<1x8x128xf32>
      %47 = vector.shape_cast %46 : vector<1x8x128xf32> to vector<8x128xf32>
      %48 = arith.addi %2, %c1_i32 : i32
      %49 = vector.broadcast %48 : i32 to vector<1x128xi32>
      %50 = arith.cmpi slt, %49, %1 : vector<1x128xi32>
      %cst_20 = arith.constant dense<0xFF800000> : vector<128xf32>
      %51 = vector.multi_reduction <maximumf>, %47, %cst_20 [0] : vector<8x128xf32> to vector<128xf32>
      %52 = vector.shape_cast %51 : vector<128xf32> to vector<1x128xf32>
      %53 = vector.broadcast %52 : vector<1x128xf32> to vector<8x128xf32>
      %54 = arith.subf %47, %53 : vector<8x128xf32>
      %55 = math.exp %54 : vector<8x128xf32>
      %cst_21 = arith.constant dense<0.000000e+00> : vector<8x128xf32>
      %56 = tpu.matmul %0, %43, %cst_21 {dimension_numbers = #tpu.dot_dimension_numbers<[1], [0], [0], [1], [0, 0, 1, 1], [], []>} : vector<8x8xf32>, vector<8x128xf32>, vector<8x128xf32> -> vector<8x128xf32>
      %57 = arith.mulf %56, %55 : vector<8x128xf32>
      %cst_22 = arith.constant dense<0xFF800000> : vector<128xf32>
      %58 = vector.multi_reduction <maximumf>, %57, %cst_22 [0] : vector<8x128xf32> to vector<128xf32>
      %59 = vector.shape_cast %58 : vector<128xf32> to vector<1x128xf32>
      %cst_23 = arith.constant 1.000000e-30 : f32
      %60 = vector.broadcast %cst_23 : f32 to vector<1x128xf32>
      %61 = arith.maximumf %59, %60 : vector<1x128xf32>
      %62 = tpu.reciprocal %61 {approx = true} : vector<1x128xf32> -> vector<1x128xf32>
      %63 = vector.broadcast %62 : vector<1x128xf32> to vector<8x128xf32>
      %64 = arith.mulf %57, %63 : vector<8x128xf32>
      %65 = arith.addf %44, %52 : vector<1x128xf32>
      %66 = math.log %62 : vector<1x128xf32>
      %67 = arith.subf %65, %66 : vector<1x128xf32>
      %68 = vector.shape_cast %50 : vector<1x128xi1> to vector<1x128xi1>
      %69 = vector.broadcast %68 : vector<1x128xi1> to vector<8x128xi1>
      %70 = arith.select %69, %64, %43 : vector<8x128xi1>, vector<8x128xf32>
      %71 = arith.select %50, %67, %44 : vector<1x128xi1>, vector<1x128xf32>
      %c2_i32 = arith.constant 2 : i32
      %72 = arith.index_cast %c2_i32 : i32 to index
      %c0_24 = arith.constant 0 : index
      %c0_25 = arith.constant 0 : index
      %73 = vector.load %arg3[%72, %c0_24, %c0_25] : memref<6x8x128xf32, #tpu.memory_space<vmem>>, vector<1x8x128xf32>
      %74 = vector.shape_cast %73 : vector<1x8x128xf32> to vector<8x128xf32>
      %75 = arith.addi %2, %c2_i32 : i32
      %76 = vector.broadcast %75 : i32 to vector<1x128xi32>
      %77 = arith.cmpi slt, %76, %1 : vector<1x128xi32>
      %cst_26 = arith.constant dense<0xFF800000> : vector<128xf32>
      %78 = vector.multi_reduction <maximumf>, %74, %cst_26 [0] : vector<8x128xf32> to vector<128xf32>
      %79 = vector.shape_cast %78 : vector<128xf32> to vector<1x128xf32>
      %80 = vector.broadcast %79 : vector<1x128xf32> to vector<8x128xf32>
      %81 = arith.subf %74, %80 : vector<8x128xf32>
      %82 = math.exp %81 : vector<8x128xf32>
      %cst_27 = arith.constant dense<0.000000e+00> : vector<8x128xf32>
      %83 = tpu.matmul %0, %70, %cst_27 {dimension_numbers = #tpu.dot_dimension_numbers<[1], [0], [0], [1], [0, 0, 1, 1], [], []>} : vector<8x8xf32>, vector<8x128xf32>, vector<8x128xf32> -> vector<8x128xf32>
      %84 = arith.mulf %83, %82 : vector<8x128xf32>
      %cst_28 = arith.constant dense<0xFF800000> : vector<128xf32>
      %85 = vector.multi_reduction <maximumf>, %84, %cst_28 [0] : vector<8x128xf32> to vector<128xf32>
      %86 = vector.shape_cast %85 : vector<128xf32> to vector<1x128xf32>
      %cst_29 = arith.constant 1.000000e-30 : f32
      %87 = vector.broadcast %cst_29 : f32 to vector<1x128xf32>
      %88 = arith.maximumf %86, %87 : vector<1x128xf32>
      %89 = tpu.reciprocal %88 {approx = true} : vector<1x128xf32> -> vector<1x128xf32>
      %90 = vector.broadcast %89 : vector<1x128xf32> to vector<8x128xf32>
      %91 = arith.mulf %84, %90 : vector<8x128xf32>
      %92 = arith.addf %71, %79 : vector<1x128xf32>
      %93 = math.log %89 : vector<1x128xf32>
      %94 = arith.subf %92, %93 : vector<1x128xf32>
      %95 = vector.shape_cast %77 : vector<1x128xi1> to vector<1x128xi1>
      %96 = vector.broadcast %95 : vector<1x128xi1> to vector<8x128xi1>
      %97 = arith.select %96, %91, %70 : vector<8x128xi1>, vector<8x128xf32>
      %98 = arith.select %77, %94, %71 : vector<1x128xi1>, vector<1x128xf32>
      %c3_i32 = arith.constant 3 : i32
      %99 = arith.index_cast %c3_i32 : i32 to index
      %c0_30 = arith.constant 0 : index
      %c0_31 = arith.constant 0 : index
      %100 = vector.load %arg3[%99, %c0_30, %c0_31] : memref<6x8x128xf32, #tpu.memory_space<vmem>>, vector<1x8x128xf32>
      %101 = vector.shape_cast %100 : vector<1x8x128xf32> to vector<8x128xf32>
      %102 = arith.addi %2, %c3_i32 : i32
      %103 = vector.broadcast %102 : i32 to vector<1x128xi32>
      %104 = arith.cmpi slt, %103, %1 : vector<1x128xi32>
      %cst_32 = arith.constant dense<0xFF800000> : vector<128xf32>
      %105 = vector.multi_reduction <maximumf>, %101, %cst_32 [0] : vector<8x128xf32> to vector<128xf32>
      %106 = vector.shape_cast %105 : vector<128xf32> to vector<1x128xf32>
      %107 = vector.broadcast %106 : vector<1x128xf32> to vector<8x128xf32>
      %108 = arith.subf %101, %107 : vector<8x128xf32>
      %109 = math.exp %108 : vector<8x128xf32>
      %cst_33 = arith.constant dense<0.000000e+00> : vector<8x128xf32>
      %110 = tpu.matmul %0, %97, %cst_33 {dimension_numbers = #tpu.dot_dimension_numbers<[1], [0], [0], [1], [0, 0, 1, 1], [], []>} : vector<8x8xf32>, vector<8x128xf32>, vector<8x128xf32> -> vector<8x128xf32>
      %111 = arith.mulf %110, %109 : vector<8x128xf32>
      %cst_34 = arith.constant dense<0xFF800000> : vector<128xf32>
      %112 = vector.multi_reduction <maximumf>, %111, %cst_34 [0] : vector<8x128xf32> to vector<128xf32>
      %113 = vector.shape_cast %112 : vector<128xf32> to vector<1x128xf32>
      %cst_35 = arith.constant 1.000000e-30 : f32
      %114 = vector.broadcast %cst_35 : f32 to vector<1x128xf32>
      %115 = arith.maximumf %113, %114 : vector<1x128xf32>
      %116 = tpu.reciprocal %115 {approx = true} : vector<1x128xf32> -> vector<1x128xf32>
      %117 = vector.broadcast %116 : vector<1x128xf32> to vector<8x128xf32>
      %118 = arith.mulf %111, %117 : vector<8x128xf32>
      %119 = arith.addf %98, %106 : vector<1x128xf32>
      %120 = math.log %116 : vector<1x128xf32>
      %121 = arith.subf %119, %120 : vector<1x128xf32>
      %122 = vector.shape_cast %104 : vector<1x128xi1> to vector<1x128xi1>
      %123 = vector.broadcast %122 : vector<1x128xi1> to vector<8x128xi1>
      %124 = arith.select %123, %118, %97 : vector<8x128xi1>, vector<8x128xf32>
      %125 = arith.select %104, %121, %98 : vector<1x128xi1>, vector<1x128xf32>
      %c4_i32 = arith.constant 4 : i32
      %126 = arith.index_cast %c4_i32 : i32 to index
      %c0_36 = arith.constant 0 : index
      %c0_37 = arith.constant 0 : index
      %127 = vector.load %arg3[%126, %c0_36, %c0_37] : memref<6x8x128xf32, #tpu.memory_space<vmem>>, vector<1x8x128xf32>
      %128 = vector.shape_cast %127 : vector<1x8x128xf32> to vector<8x128xf32>
      %129 = arith.addi %2, %c4_i32 : i32
      %130 = vector.broadcast %129 : i32 to vector<1x128xi32>
      %131 = arith.cmpi slt, %130, %1 : vector<1x128xi32>
      %cst_38 = arith.constant dense<0xFF800000> : vector<128xf32>
      %132 = vector.multi_reduction <maximumf>, %128, %cst_38 [0] : vector<8x128xf32> to vector<128xf32>
      %133 = vector.shape_cast %132 : vector<128xf32> to vector<1x128xf32>
      %134 = vector.broadcast %133 : vector<1x128xf32> to vector<8x128xf32>
      %135 = arith.subf %128, %134 : vector<8x128xf32>
      %136 = math.exp %135 : vector<8x128xf32>
      %cst_39 = arith.constant dense<0.000000e+00> : vector<8x128xf32>
      %137 = tpu.matmul %0, %124, %cst_39 {dimension_numbers = #tpu.dot_dimension_numbers<[1], [0], [0], [1], [0, 0, 1, 1], [], []>} : vector<8x8xf32>, vector<8x128xf32>, vector<8x128xf32> -> vector<8x128xf32>
      %138 = arith.mulf %137, %136 : vector<8x128xf32>
      %cst_40 = arith.constant dense<0xFF800000> : vector<128xf32>
      %139 = vector.multi_reduction <maximumf>, %138, %cst_40 [0] : vector<8x128xf32> to vector<128xf32>
      %140 = vector.shape_cast %139 : vector<128xf32> to vector<1x128xf32>
      %cst_41 = arith.constant 1.000000e-30 : f32
      %141 = vector.broadcast %cst_41 : f32 to vector<1x128xf32>
      %142 = arith.maximumf %140, %141 : vector<1x128xf32>
      %143 = tpu.reciprocal %142 {approx = true} : vector<1x128xf32> -> vector<1x128xf32>
      %144 = vector.broadcast %143 : vector<1x128xf32> to vector<8x128xf32>
      %145 = arith.mulf %138, %144 : vector<8x128xf32>
      %146 = arith.addf %125, %133 : vector<1x128xf32>
      %147 = math.log %143 : vector<1x128xf32>
      %148 = arith.subf %146, %147 : vector<1x128xf32>
      %149 = vector.shape_cast %131 : vector<1x128xi1> to vector<1x128xi1>
      %150 = vector.broadcast %149 : vector<1x128xi1> to vector<8x128xi1>
      %151 = arith.select %150, %145, %124 : vector<8x128xi1>, vector<8x128xf32>
      %152 = arith.select %131, %148, %125 : vector<1x128xi1>, vector<1x128xf32>
      %c5_i32 = arith.constant 5 : i32
      %153 = arith.index_cast %c5_i32 : i32 to index
      %c0_42 = arith.constant 0 : index
      %c0_43 = arith.constant 0 : index
      %154 = vector.load %arg3[%153, %c0_42, %c0_43] : memref<6x8x128xf32, #tpu.memory_space<vmem>>, vector<1x8x128xf32>
      %155 = vector.shape_cast %154 : vector<1x8x128xf32> to vector<8x128xf32>
      %156 = arith.addi %2, %c5_i32 : i32
      %157 = vector.broadcast %156 : i32 to vector<1x128xi32>
      %158 = arith.cmpi slt, %157, %1 : vector<1x128xi32>
      %cst_44 = arith.constant dense<0xFF800000> : vector<128xf32>
      %159 = vector.multi_reduction <maximumf>, %155, %cst_44 [0] : vector<8x128xf32> to vector<128xf32>
      %160 = vector.shape_cast %159 : vector<128xf32> to vector<1x128xf32>
      %161 = vector.broadcast %160 : vector<1x128xf32> to vector<8x128xf32>
      %162 = arith.subf %155, %161 : vector<8x128xf32>
      %163 = math.exp %162 : vector<8x128xf32>
      %cst_45 = arith.constant dense<0.000000e+00> : vector<8x128xf32>
      %164 = tpu.matmul %0, %151, %cst_45 {dimension_numbers = #tpu.dot_dimension_numbers<[1], [0], [0], [1], [0, 0, 1, 1], [], []>} : vector<8x8xf32>, vector<8x128xf32>, vector<8x128xf32> -> vector<8x128xf32>
      %165 = arith.mulf %164, %163 : vector<8x128xf32>
      %cst_46 = arith.constant dense<0xFF800000> : vector<128xf32>
      %166 = vector.multi_reduction <maximumf>, %165, %cst_46 [0] : vector<8x128xf32> to vector<128xf32>
      %167 = vector.shape_cast %166 : vector<128xf32> to vector<1x128xf32>
      %cst_47 = arith.constant 1.000000e-30 : f32
      %168 = vector.broadcast %cst_47 : f32 to vector<1x128xf32>
      %169 = arith.maximumf %167, %168 : vector<1x128xf32>
      %170 = tpu.reciprocal %169 {approx = true} : vector<1x128xf32> -> vector<1x128xf32>
      %171 = vector.broadcast %170 : vector<1x128xf32> to vector<8x128xf32>
      %172 = arith.mulf %165, %171 : vector<8x128xf32>
      %173 = arith.addf %152, %160 : vector<1x128xf32>
      %174 = math.log %170 : vector<1x128xf32>
      %175 = arith.subf %173, %174 : vector<1x128xf32>
      %176 = vector.shape_cast %158 : vector<1x128xi1> to vector<1x128xi1>
      %177 = vector.broadcast %176 : vector<1x128xi1> to vector<8x128xi1>
      %178 = arith.select %177, %172, %151 : vector<8x128xi1>, vector<8x128xf32>
      %179 = arith.select %158, %175, %152 : vector<1x128xi1>, vector<1x128xf32>
      %c6_i32_48 = arith.constant 6 : i32
      %c0_49 = arith.constant 0 : index
      %c0_50 = arith.constant 0 : index
      %180 = vector.load %arg9[%c0_49, %c0_50] : memref<8x128xf32, #tpu.memory_space<vmem>>, vector<8x128xf32>
      tpu.vector_store %arg9[%c0_49, %c0_50], %178 {strides = array<i32>} : memref<8x128xf32, #tpu.memory_space<vmem>>, vector<8x128xf32>,
      %c0_51 = arith.constant 0 : index
      %c0_52 = arith.constant 0 : index
      %181 = vector.load %arg10[%c0_51, %c0_52] : memref<1x128xf32, #tpu.memory_space<vmem>>, vector<1x128xf32>
      tpu.vector_store %arg10[%c0_51, %c0_52], %179 {strides = array<i32>} : memref<1x128xf32, #tpu.memory_space<vmem>>, vector<1x128xf32>,
    } else {
    }
    %c0_i32_6 = arith.constant 0 : i32
    %13 = arith.cmpi eq, %arg1, %c0_i32_6 : i32
    %14 = arith.extui %13 : i1 to i32
    %c0_i32_7 = arith.constant 0 : i32
    %15 = arith.cmpi ne, %14, %c0_i32_7 : i32
    scf.if %15 {
      %c0_8 = arith.constant 0 : index
      %c0_9 = arith.constant 0 : index
      %16 = vector.load %arg9[%c0_8, %c0_9] : memref<8x128xf32, #tpu.memory_space<vmem>>, vector<8x128xf32>
      %c0_10 = arith.constant 0 : index
      %c0_11 = arith.constant 0 : index
      %17 = vector.load %arg6[%c0_10, %c0_11] : memref<8x1xf32, #tpu.memory_space<vmem>>, vector<8x1xf32>
      %18 = vector.broadcast %17 : vector<8x1xf32> to vector<8x128xf32>
      %19 = arith.mulf %16, %18 : vector<8x128xf32>
      %cst = arith.constant dense<0.000000e+00> : vector<128xf32>
      %20 = vector.multi_reduction <add>, %19, %cst [0] : vector<8x128xf32> to vector<128xf32>
      %21 = vector.shape_cast %20 : vector<128xf32> to vector<1x128xf32>
      %c0_12 = arith.constant 0 : index
      %c0_13 = arith.constant 0 : index
      %22 = vector.load %arg10[%c0_12, %c0_13] : memref<1x128xf32, #tpu.memory_space<vmem>>, vector<1x128xf32>
      %23 = math.log %21 : vector<1x128xf32>
      %24 = arith.addf %22, %23 : vector<1x128xf32>
      %c0_14 = arith.constant 0 : index
      %c0_15 = arith.constant 0 : index
      %25 = vector.load %arg8[%c0_14, %c0_15] : memref<1x128xf32, #tpu.memory_space<vmem>>, vector<1x128xf32>
      tpu.vector_store %arg8[%c0_14, %c0_15], %24 {strides = array<i32>} : memref<1x128xf32, #tpu.memory_space<vmem>>, vector<1x128xf32>,
    } else {
    }
    return
  }
  func.func @transform_0(%arg0: i32, %arg1: i32, %arg2: memref<1xi32, #tpu.memory_space<smem>>) -> (i32, i32, i32) {
    %0 = arith.index_cast %arg0 : i32 to index
    %1 = memref.load %arg2[%0] : memref<1xi32, #tpu.memory_space<smem>>
    %c1_i32 = arith.constant 1 : i32
    %2 = arith.subi %1, %c1_i32 : i32
    %3 = arith.minsi %arg1, %2 : i32
    %c0_i32 = arith.constant 0 : i32
    %c0_i32_0 = arith.constant 0 : i32
    return %3, %c0_i32, %arg0 : i32, i32, i32
  }
  func.func @transform_1(%arg0: i32, %arg1: i32, %arg2: memref<1xi32, #tpu.memory_space<smem>>) -> (i32, i32) {
    %c0_i32 = arith.constant 0 : i32
    %c0_i32_0 = arith.constant 0 : i32
    return %c0_i32, %arg0 : i32, i32
  }
  func.func @transform_2(%arg0: i32, %arg1: i32, %arg2: memref<1xi32, #tpu.memory_space<smem>>) -> (i32, i32) {
    %c0_i32 = arith.constant 0 : i32
    %c0_i32_0 = arith.constant 0 : i32
    %c0_i32_1 = arith.constant 0 : i32
    return %c0_i32, %c0_i32_0 : i32, i32
  }
  func.func @transform_3(%arg0: i32, %arg1: i32, %arg2: memref<1xi32, #tpu.memory_space<smem>>) -> (i32, i32) {
    %c0_i32 = arith.constant 0 : i32
    %c0_i32_0 = arith.constant 0 : i32
    %c0_i32_1 = arith.constant 0 : i32
    return %c0_i32, %c0_i32_0 : i32, i32
  }
  func.func @transform_4(%arg0: i32, %arg1: i32, %arg2: memref<1xi32, #tpu.memory_space<smem>>) -> (i32, i32) {
    %c0_i32 = arith.constant 0 : i32
    %c0_i32_0 = arith.constant 0 : i32
    %c0_i32_1 = arith.constant 0 : i32
    return %c0_i32, %c0_i32_0 : i32, i32
  }
  func.func @transform_5(%arg0: i32, %arg1: i32, %arg2: memref<1xi32, #tpu.memory_space<smem>>) -> (i32, i32) {
    %c0_i32 = arith.constant 0 : i32
    %c0_i32_0 = arith.constant 0 : i32
    return %c0_i32, %arg0 : i32, i32
  }
}

</mosaic_0001>

<llo_original>
// kernel: crf_log_likelihood.1
$region0: #{crf_log_likelihood.1}
  #allocation0 [shape = 'u32[]', space=smem, size = 0x4, offset = 0x4, fixed_abs, tag = 'smem constant byte address 0x4 - core index']
  #allocation1 [shape = 'u32[72,128]{1,0:T(1,128)}', space=vmem, size = 0x9000, scoped, tag = 'internal scratch']
  #allocation2 [shape = 'f32[8,128]{1,0:T(8,128)}', space=vmem, size = 0x1000, scoped, tag = 'scratch operand']
  #allocation3 [shape = 'f32[1,128]{1,0:T(1,128)}', space=vmem, size = 0x200, scoped, tag = 'scratch operand']
  #allocation4 [shape = 's32[1]{0}', space=sflag, size = 0x4, scoped, tag = 'scoped memory for crf_log_likelihood.1']
  #allocation5 [shape = 's32[1]{0:T(128)S(6)}', space=smem, size = 0x200, scoped, tag = 'prefetched SMEM operand 0']
  %s0 = inlined_call_operand.<no memory space> [shape: s32[1], index: 0, kind: input, shape index: {}]
  %s1 = inlined_call_operand.vmem [shape: f32[6,8,128], index: 1, kind: input, shape index: {}]
  %s2 = inlined_call_operand.vmem [shape: s32[1,128], index: 2, kind: input, shape index: {}]
  %s3 = inlined_call_operand.vmem [shape: f32[8,1], index: 3, kind: input, shape index: {}]
  %s4 = inlined_call_operand.vmem [shape: f32[8,1], index: 4, kind: input, shape index: {}]
  %s5 = inlined_call_operand.vmem [shape: f32[8,8], index: 5, kind: input, shape index: {}]
  %s6 = inlined_call_operand.vmem [shape: f32[1,128], index: 6, kind: output, shape index: {}]
  %s7 = sld [smem:[#allocation0]]
  $region42: #{crf_log_likelihood.1} parent=0
    _
  %s9 = ssub.s32 1, %s7
  %s10 = scalar_select 0, %s9, %s7
  %11 = sst [smem:[#allocation5]] %s0
  // Predicated region
  $region2: #{crf_log_likelihood.1} parent=0 // pred_check
    _
  $region3: #{crf_log_likelihood.1} parent=0 // pred_check_branch
    %13 = sbr.rel (0) target = $region5
  $region4: #{crf_log_likelihood.1} parent=0 // pred_region
    %s14 = sld [smem:[#allocation5]]
    %s15 = ssub.s32 %s14, 1
    %p16 = scmp.lt.s32.totalorder 0, %s15
    %s17 = scalar_select %p16, 0, %s15
    %s18 = smul.u32 6, %s17
    %p19 = scmp.lt.s32.totalorder %s18, 5
    %s20 = scalar_select %p19, %s18, 5
    %s21 = smul.addr %s20, 8
    %s22 = scalar_lea.vmem %s1, %s21
    %s23 = sld [smem:[#allocation5]]
    %s24 = ssub.s32 %s23, 1
    %p25 = scmp.lt.s32.totalorder 0, %s24
    %s26 = scalar_select %p25, 0, %s24
    %s27 = smul.u32 6, %s26
  $region5: #{crf_log_likelihood.1} parent=0 // pred_fallthru
    _
  // Predicated region
  $region6: #{crf_log_likelihood.1} parent=0 // pred_check
    _
  $region7: #{crf_log_likelihood.1} parent=0 // pred_check_branch
    %29 = sbr.rel (0) target = $region9
  $region8: #{crf_log_likelihood.1} parent=0 // pred_region
    _
  $region9: #{crf_log_likelihood.1} parent=0 // pred_fallthru
    _
  // Predicated region
  $region10: #{crf_log_likelihood.1} parent=0 // pred_check
    _
  $region11: #{crf_log_likelihood.1} parent=0 // pred_check_branch
    %31 = sbr.rel (0) target = $region13
  $region12: #{crf_log_likelihood.1} parent=0 // pred_region
    _
  $region13: #{crf_log_likelihood.1} parent=0 // pred_fallthru
    _
  // Predicated region
  $region14: #{crf_log_likelihood.1} parent=0 // pred_check
    _
  $region15: #{crf_log_likelihood.1} parent=0 // pred_check_branch
    %33 = sbr.rel (0) target = $region17
  $region16: #{crf_log_likelihood.1} parent=0 // pred_region
    _
  $region17: #{crf_log_likelihood.1} parent=0 // pred_fallthru
    _
  // Predicated region
  $region18: #{crf_log_likelihood.1} parent=0 // pred_check
    _
  $region19: #{crf_log_likelihood.1} parent=0 // pred_check_branch
    %35 = sbr.rel (0) target = $region21
  $region20: #{crf_log_likelihood.1} parent=0 // pred_region
    _
  $region21: #{crf_log_likelihood.1} parent=0 // pred_fallthru
    _
  %s36 = sld [smem:[#allocation5]]
  %s37 = ssub.s32 %s36, 1
  %p38 = scmp.lt.s32.totalorder 0, %s37
  %s39 = scalar_select %p38, 0, %s37
  %s40 = smul.u32 6, %s39
  %p41 = scmp.lt.s32.totalorder %s40, 5
  %s42 = scalar_select %p41, %s40, 5
  %s43 = smul.addr %s42, 8
  %s44 = scalar_lea.vmem %s1, %s43
  %s45 = sld [smem:[#allocation5]]
  %s46 = ssub.s32 %s45, 1
  %p47 = scmp.lt.s32.totalorder 0, %s46
  %s48 = scalar_select %p47, 0, %s46
  %s49 = smul.u32 6, %s48
  %p50 = scmp.lt.s32.totalorder %s49, 5
  %s51 = scalar_select %p50, %s49, 5
  %s52 = smul.addr %s51, 8
  %s53 = scalar_lea.vmem %s1, %s52
  %s54 = sld [smem:[#allocation5]]
  %s55 = ssub.s32 %s54, 1
  %p56 = scmp.lt.s32.totalorder 0, %s55
  %s57 = scalar_select %p56, 0, %s55
  %s58 = smul.u32 6, %s57
  %v59 = vld [vmem:[%s5] sm:$0xff]
  %v60 = vld [vmem:[%s2] sm:$0x1]
  %s61 = smul.u32 0, 6
  %p62 = scmp.eq.s32.totalorder 0, 0
  // Predicated region
  $region22: #{crf_log_likelihood.1} parent=0 // pred_check
    %p63 = pneg %p62
  $region23: #{crf_log_likelihood.1} parent=0 // pred_check_branch
    %65 = sbr.rel (%p63) target = $region25
  $region24: #{crf_log_likelihood.1} parent=0 // pred_region
    %v66 = vld [vmem:[%s3] sm:$0xff]
    %v67 = vld [vmem:[%s53] sm:$0xff]
    %69 = vset.pattern.permute.xlu0 0
    %70 = vperm.xlu0 %69, %v66
    %v71 = vpop.permute.xlu0 %70
    %v73 = vadd.f32 %v71, %v67
    %v74 = vrot.slane %v73, 4
    %v75 = vmax.f32 %v73, %v74
    %v76 = vrot.slane %v75, 2
    %v77 = vmax.f32 %v75, %v76
    %v78 = vrot.slane %v77, 1
    %v79 = vmax.f32 %v77, %v78
    %v80 = vsub.f32 %v73, %v79
    %v81 = vmul.f32 %v80, 1.442695
    %v82 = vpow.pop %v81
    %s83 = scalar_lea.vmem %s53, 8
    %v84 = vld [vmem:[%s83] sm:$0xff]
    %s85 = sadd.s32 %s61, 1
    %v86 = vstv %s85
    %vm87 = vcmp.lt.s32.totalorder %v86, %v60
    %v88 = vrot.slane %v84, 4
    %v89 = vmax.f32 %v84, %v88
    %v90 = vrot.slane %v89, 2
    %v91 = vmax.f32 %v89, %v90
    %v92 = vrot.slane %v91, 1
    %v93 = vmax.f32 %v91, %v92
    %v94 = vsub.f32 %v84, %v93
    %v95 = vmul.f32 %v94, 1.442695
    %v96 = vpow.pop %v95
    %vm97 = vcmask 64512
    %v99 = vsel %vm97, %v59, 0
    %101 = vmatpush.msra.mxu0 0.0
    %102 = vmatpush.msra.mxu0 0.0
    %103 = vmatpush.msra.mxu0 0.0
    %104 = vmatpush.msra.mxu0 0.0
    %105 = vmatpush.msra.mxu0 0.0
    %106 = vmatpush.msra.mxu0 0.0
    %107 = vmatpush.msra.mxu0 0.0
    %108 = vmatpush.msra.mxu0 0.0
    %109 = vmatpush.msra.mxu0 0.0
    %110 = vmatpush.msra.mxu0 0.0
    %111 = vmatpush.msra.mxu0 0.0
    %112 = vmatpush.msra.mxu0 0.0
    %113 = vmatpush.msra.mxu0 0.0
    %114 = vmatpush.msra.mxu0 0.0
    %115 = vmatpush.msra.mxu0 0.0
    %116 = vmatpush.msra.mxu0 %v82
    %117 = vmatmul.f32.gmra.mxu0 %v99
    %v118 = vpop.f32.mrf.mxu0
    %v119 = vadd.f32 0.0, %v118
    %120 = vdwg.mxu0
    %v121 = vmul.f32 %v119, %v96
    %v122 = vrot.slane %v121, 4
    %v123 = vmax.f32 %v121, %v122
    %v124 = vrot.slane %v123, 2
    %v125 = vmax.f32 %v123, %v124
    %v126 = vrot.slane %v125, 1
    %v127 = vmax.f32 %v125, %v126
    %v128 = vmax.f32 %v127, 1e-30
    %v129 = vrcp.pop %v128
    %v130 = vmul.f32 %v121, %v129
    %v131 = vadd.f32 %v79, %v93
    %v132 = vlog2.pop %v129
    %v133 = vmul.f32 %v132, 0.6931472
    %v134 = vsub.f32 %v131, %v133
    %v135 = vsel %vm87, 1, 0
    %v136 = vperm.slane %v135, 0
    %vm137 = vcmp.eq.s32.totalorder %v136, 1
    %v138 = vsel %vm137, %v130, %v82
    %v139 = vsel %vm87, %v134, %v79
    %s140 = scalar_lea.vmem %s53, 16
    %v141 = vld [vmem:[%s140] sm:$0xff]
    %s142 = sadd.s32 %s61, 2
    %v143 = vstv %s142
    %vm144 = vcmp.lt.s32.totalorder %v143, %v60
    %v145 = vrot.slane %v141, 4
    %v146 = vmax.f32 %v141, %v145
    %v147 = vrot.slane %v146, 2
    %v148 = vmax.f32 %v146, %v147
    %v149 = vrot.slane %v148, 1
    %v150 = vmax.f32 %v148, %v149
    %v151 = vsub.f32 %v141, %v150
    %v152 = vmul.f32 %v151, 1.442695
    %v153 = vpow.pop %v152
    %154 = vmatpush.msra.mxu0 0.0
    %155 = vmatpush.msra.mxu0 0.0
    %156 = vmatpush.msra.mxu0 0.0
    %157 = vmatpush.msra.mxu0 0.0
    %158 = vmatpush.msra.mxu0 0.0
    %159 = vmatpush.msra.mxu0 0.0
    %160 = vmatpush.msra.mxu0 0.0
    %161 = vmatpush.msra.mxu0 0.0
    %162 = vmatpush.msra.mxu0 0.0
    %163 = vmatpush.msra.mxu0 0.0
    %164 = vmatpush.msra.mxu0 0.0
    %165 = vmatpush.msra.mxu0 0.0
    %166 = vmatpush.msra.mxu0 0.0
    %167 = vmatpush.msra.mxu0 0.0
    %168 = vmatpush.msra.mxu0 0.0
    %169 = vmatpush.msra.mxu0 %v138
    %170 = vmatmul.f32.gmra.mxu0 %v99
    %v171 = vpop.f32.mrf.mxu0
    %v172 = vadd.f32 0.0, %v171
    %173 = vdwg.mxu0
    %v174 = vmul.f32 %v172, %v153
    %v175 = vrot.slane %v174, 4
    %v176 = vmax.f32 %v174, %v175
    %v177 = vrot.slane %v176, 2
    %v178 = vmax.f32 %v176, %v177
    %v179 = vrot.slane %v178, 1
    %v180 = vmax.f32 %v178, %v179
    %v181 = vmax.f32 %v180, 1e-30
    %v182 = vrcp.pop %v181
    %v183 = vmul.f32 %v174, %v182
    %v184 = vadd.f32 %v139, %v150
    %v185 = vlog2.pop %v182
    %v186 = vmul.f32 %v185, 0.6931472
    %v187 = vsub.f32 %v184, %v186
    %v188 = vsel %vm144, 1, 0
    %v189 = vperm.slane %v188, 0
    %vm190 = vcmp.eq.s32.totalorder %v189, 1
    %v191 = vsel %vm190, %v183, %v138
    %v192 = vsel %vm144, %v187, %v139
    %s193 = scalar_lea.vmem %s53, 24
    %v194 = vld [vmem:[%s193] sm:$0xff]
    %s195 = sadd.s32 %s61, 3
    %v196 = vstv %s195
    %vm197 = vcmp.lt.s32.totalorder %v196, %v60
    %v198 = vrot.slane %v194, 4
    %v199 = vmax.f32 %v194, %v198
    %v200 = vrot.slane %v199, 2
    %v201 = vmax.f32 %v199, %v200
    %v202 = vrot.slane %v201, 1
    %v203 = vmax.f32 %v201, %v202
    %v204 = vsub.f32 %v194, %v203
    %v205 = vmul.f32 %v204, 1.442695
    %v206 = vpow.pop %v205
    %207 = vmatpush.msra.mxu0 0.0
    %208 = vmatpush.msra.mxu0 0.0
    %209 = vmatpush.msra.mxu0 0.0
    %210 = vmatpush.msra.mxu0 0.0
    %211 = vmatpush.msra.mxu0 0.0
    %212 = vmatpush.msra.mxu0 0.0
    %213 = vmatpush.msra.mxu0 0.0
    %214 = vmatpush.msra.mxu0 0.0
    %215 = vmatpush.msra.mxu0 0.0
    %216 = vmatpush.msra.mxu0 0.0
    %217 = vmatpush.msra.mxu0 0.0
    %218 = vmatpush.msra.mxu0 0.0
    %219 = vmatpush.msra.mxu0 0.0
    %220 = vmatpush.msra.mxu0 0.0
    %221 = vmatpush.msra.mxu0 0.0
    %222 = vmatpush.msra.mxu0 %v191
    %223 = vmatmul.f32.gmra.mxu0 %v99
    %v224 = vpop.f32.mrf.mxu0
    %v225 = vadd.f32 0.0, %v224
    %226 = vdwg.mxu0
    %v227 = vmul.f32 %v225, %v206
    %v228 = vrot.slane %v227, 4
    %v229 = vmax.f32 %v227, %v228
    %v230 = vrot.slane %v229, 2
    %v231 = vmax.f32 %v229, %v230
    %v232 = vrot.slane %v231, 1
    %v233 = vmax.f32 %v231, %v232
    %v234 = vmax.f32 %v233, 1e-30
    %v235 = vrcp.pop %v234
    %v236 = vmul.f32 %v227, %v235
    %v237 = vadd.f32 %v192, %v203
    %v238 = vlog2.pop %v235
    %v239 = vmul.f32 %v238, 0.6931472
    %v240 = vsub.f32 %v237, %v239
    %v241 = vsel %vm197, 1, 0
    %v242 = vperm.slane %v241, 0
    %vm243 = vcmp.eq.s32.totalorder %v242, 1
    %v244 = vsel %vm243, %v236, %v191
    %v245 = vsel %vm197, %v240, %v192
    %s246 = scalar_lea.vmem %s53, 32
    %v247 = vld [vmem:[%s246] sm:$0xff]
    %s248 = sadd.s32 %s61, 4
    %v249 = vstv %s248
    %vm250 = vcmp.lt.s32.totalorder %v249, %v60
    %v251 = vrot.slane %v247, 4
    %v252 = vmax.f32 %v247, %v251
    %v253 = vrot.slane %v252, 2
    %v254 = vmax.f32 %v252, %v253
    %v255 = vrot.slane %v254, 1
    %v256 = vmax.f32 %v254, %v255
    %v257 = vsub.f32 %v247, %v256
    %v258 = vmul.f32 %v257, 1.442695
    %v259 = vpow.pop %v258
    %260 = vmatpush.msra.mxu0 0.0
    %261 = vmatpush.msra.mxu0 0.0
    %262 = vmatpush.msra.mxu0 0.0
    %263 = vmatpush.msra.mxu0 0.0
    %264 = vmatpush.msra.mxu0 0.0
    %265 = vmatpush.msra.mxu0 0.0
    %266 = vmatpush.msra.mxu0 0.0
    %267 = vmatpush.msra.mxu0 0.0
    %268 = vmatpush.msra.mxu0 0.0
    %269 = vmatpush.msra.mxu0 0.0
    %270 = vmatpush.msra.mxu0 0.0
    %271 = vmatpush.msra.mxu0 0.0
    %272 = vmatpush.msra.mxu0 0.0
    %273 = vmatpush.msra.mxu0 0.0
    %274 = vmatpush.msra.mxu0 0.0
    %275 = vmatpush.msra.mxu0 %v244
    %276 = vmatmul.f32.gmra.mxu0 %v99
    %v277 = vpop.f32.mrf.mxu0
    %v278 = vadd.f32 0.0, %v277
    %279 = vdwg.mxu0
    %v280 = vmul.f32 %v278, %v259
    %v281 = vrot.slane %v280, 4
    %v282 = vmax.f32 %v280, %v281
    %v283 = vrot.slane %v282, 2
    %v284 = vmax.f32 %v282, %v283
    %v285 = vrot.slane %v284, 1
    %v286 = vmax.f32 %v284, %v285
    %v287 = vmax.f32 %v286, 1e-30
    %v288 = vrcp.pop %v287
    %v289 = vmul.f32 %v280, %v288
    %v290 = vadd.f32 %v245, %v256
    %v291 = vlog2.pop %v288
    %v292 = vmul.f32 %v291, 0.6931472
    %v293 = vsub.f32 %v290, %v292
    %v294 = vsel %vm250, 1, 0
    %v295 = vperm.slane %v294, 0
    %vm296 = vcmp.eq.s32.totalorder %v295, 1
    %v297 = vsel %vm296, %v289, %v244
    %v298 = vsel %vm250, %v293, %v245
    %s299 = scalar_lea.vmem %s53, 40
    %v300 = vld [vmem:[%s299] sm:$0xff]
    %s301 = sadd.s32 %s61, 5
    %v302 = vstv %s301
    %vm303 = vcmp.lt.s32.totalorder %v302, %v60
    %v304 = vrot.slane %v300, 4
    %v305 = vmax.f32 %v300, %v304
    %v306 = vrot.slane %v305, 2
    %v307 = vmax.f32 %v305, %v306
    %v308 = vrot.slane %v307, 1
    %v309 = vmax.f32 %v307, %v308
    %v310 = vsub.f32 %v300, %v309
    %v311 = vmul.f32 %v310, 1.442695
    %v312 = vpow.pop %v311
    %313 = vmatpush.msra.mxu0 0.0
    %314 = vmatpush.msra.mxu0 0.0
    %315 = vmatpush.msra.mxu0 0.0
    %316 = vmatpush.msra.mxu0 0.0
    %317 = vmatpush.msra.mxu0 0.0
    %318 = vmatpush.msra.mxu0 0.0
    %319 = vmatpush.msra.mxu0 0.0
    %320 = vmatpush.msra.mxu0 0.0
    %321 = vmatpush.msra.mxu0 0.0
    %322 = vmatpush.msra.mxu0 0.0
    %323 = vmatpush.msra.mxu0 0.0
    %324 = vmatpush.msra.mxu0 0.0
    %325 = vmatpush.msra.mxu0 0.0
    %326 = vmatpush.msra.mxu0 0.0
    %327 = vmatpush.msra.mxu0 0.0
    %328 = vmatpush.msra.mxu0 %v297
    %329 = vmatmul.f32.gmra.mxu0 %v99
    %v330 = vpop.f32.mrf.mxu0
    %v331 = vadd.f32 0.0, %v330
    %332 = vdwg.mxu0
    %v333 = vmul.f32 %v331, %v312
    %v334 = vrot.slane %v333, 4
    %v335 = vmax.f32 %v333, %v334
    %v336 = vrot.slane %v335, 2
    %v337 = vmax.f32 %v335, %v336
    %v338 = vrot.slane %v337, 1
    %v339 = vmax.f32 %v337, %v338
    %v340 = vmax.f32 %v339, 1e-30
    %v341 = vrcp.pop %v340
    %v342 = vmul.f32 %v333, %v341
    %v343 = vadd.f32 %v298, %v309
    %v344 = vlog2.pop %v341
    %v345 = vmul.f32 %v344, 0.6931472
    %v346 = vsub.f32 %v343, %v345
    %v347 = vsel %vm303, 1, 0
    %v348 = vperm.slane %v347, 0
    %vm349 = vcmp.eq.s32.totalorder %v348, 1
    %v350 = vsel %vm349, %v342, %v297
    %v351 = vsel %vm303, %v346, %v298
    %352 = vst [vmem:[#allocation2] sm:$0xff] %v350
    %353 = vst [vmem:[#allocation3] sm:$0x1] %v351
  $region25: #{crf_log_likelihood.1} parent=0 // pred_fallthru
    _
  %p354 = scmp.gt.s32.totalorder 0, 0
  %s355 = sld [smem:[#allocation5]]
  %p356 = scmp.lt.s32.totalorder 0, %s355
  %p357 = pnand %p354, %p356
  %p358 = pneg %p357
  // Predicated region
  $region26: #{crf_log_likelihood.1} parent=0 // pred_check
    _
  $region27: #{crf_log_likelihood.1} parent=0 // pred_check_branch
    %360 = sbr.rel (%p357) target = $region29
  $region28: #{crf_log_likelihood.1} parent=0 // pred_region
    %v361 = vld [vmem:[#allocation2] sm:$0xff]
    %v362 = vld [vmem:[#allocation3] sm:$0x1]
    %v363 = vld [vmem:[%s53] sm:$0xff]
    %v364 = vstv %s61
    %vm365 = vcmp.lt.s32.totalorder %v364, %v60
    %v366 = vrot.slane %v363, 4
    %v367 = vmax.f32 %v363, %v366
    %v368 = vrot.slane %v367, 2
    %v369 = vmax.f32 %v367, %v368
    %v370 = vrot.slane %v369, 1
    %v371 = vmax.f32 %v369, %v370
    %v372 = vsub.f32 %v363, %v371
    %v373 = vmul.f32 %v372, 1.442695
    %v374 = vpow.pop %v373
    %vm375 = vcmask 64512
    %v377 = vsel %vm375, %v59, 0
    %379 = vmatpush.msra.mxu0 0.0
    %380 = vmatpush.msra.mxu0 0.0
    %381 = vmatpush.msra.mxu0 0.0
    %382 = vmatpush.msra.mxu0 0.0
    %383 = vmatpush.msra.mxu0 0.0
    %384 = vmatpush.msra.mxu0 0.0
    %385 = vmatpush.msra.mxu0 0.0
    %386 = vmatpush.msra.mxu0 0.0
    %387 = vmatpush.msra.mxu0 0.0
    %388 = vmatpush.msra.mxu0 0.0
    %389 = vmatpush.msra.mxu0 0.0
    %390 = vmatpush.msra.mxu0 0.0
    %391 = vmatpush.msra.mxu0 0.0
    %392 = vmatpush.msra.mxu0 0.0
    %393 = vmatpush.msra.mxu0 0.0
    %394 = vmatpush.msra.mxu0 %v361
    %395 = vmatmul.f32.gmra.mxu0 %v377
    %v396 = vpop.f32.mrf.mxu0
    %v397 = vadd.f32 0.0, %v396
    %398 = vdwg.mxu0
    %v399 = vmul.f32 %v397, %v374
    %v400 = vrot.slane %v399, 4
    %v401 = vmax.f32 %v399, %v400
    %v402 = vrot.slane %v401, 2
    %v403 = vmax.f32 %v401, %v402
    %v404 = vrot.slane %v403, 1
    %v405 = vmax.f32 %v403, %v404
    %v406 = vmax.f32 %v405, 1e-30
    %v407 = vrcp.pop %v406
    %v408 = vmul.f32 %v399, %v407
    %v409 = vadd.f32 %v362, %v371
    %v410 = vlog2.pop %v407
    %v411 = vmul.f32 %v410, 0.6931472
    %v412 = vsub.f32 %v409, %v411
    %v413 = vsel %vm365, 1, 0
    %v414 = vperm.slane %v413, 0
    %vm415 = vcmp.eq.s32.totalorder %v414, 1
    %v416 = vsel %vm415, %v408, %v361
    %v417 = vsel %vm365, %v412, %v362
    %s418 = scalar_lea.vmem %s53, 8
    %v419 = vld [vmem:[%s418] sm:$0xff]
    %s420 = sadd.s32 %s61, 1
    %v421 = vstv %s420
    %vm422 = vcmp.lt.s32.totalorder %v421, %v60
    %v423 = vrot.slane %v419, 4
    %v424 = vmax.f32 %v419, %v423
    %v425 = vrot.slane %v424, 2
    %v426 = vmax.f32 %v424, %v425
    %v427 = vrot.slane %v426, 1
    %v428 = vmax.f32 %v426, %v427
    %v429 = vsub.f32 %v419, %v428
    %v430 = vmul.f32 %v429, 1.442695
    %v431 = vpow.pop %v430
    %432 = vmatpush.msra.mxu0 0.0
    %433 = vmatpush.msra.mxu0 0.0
    %434 = vmatpush.msra.mxu0 0.0
    %435 = vmatpush.msra.mxu0 0.0
    %436 = vmatpush.msra.mxu0 0.0
    %437 = vmatpush.msra.mxu0 0.0
    %438 = vmatpush.msra.mxu0 0.0
    %439 = vmatpush.msra.mxu0 0.0
    %440 = vmatpush.msra.mxu0 0.0
    %441 = vmatpush.msra.mxu0 0.0
    %442 = vmatpush.msra.mxu0 0.0
    %443 = vmatpush.msra.mxu0 0.0
    %444 = vmatpush.msra.mxu0 0.0
    %445 = vmatpush.msra.mxu0 0.0
    %446 = vmatpush.msra.mxu0 0.0
    %447 = vmatpush.msra.mxu0 %v416
    %448 = vmatmul.f32.gmra.mxu0 %v377
    %v449 = vpop.f32.mrf.mxu0
    %v450 = vadd.f32 0.0, %v449
    %451 = vdwg.mxu0
    %v452 = vmul.f32 %v450, %v431
    %v453 = vrot.slane %v452, 4
    %v454 = vmax.f32 %v452, %v453
    %v455 = vrot.slane %v454, 2
    %v456 = vmax.f32 %v454, %v455
    %v457 = vrot.slane %v456, 1
    %v458 = vmax.f32 %v456, %v457
    %v459 = vmax.f32 %v458, 1e-30
    %v460 = vrcp.pop %v459
    %v461 = vmul.f32 %v452, %v460
    %v462 = vadd.f32 %v417, %v428
    %v463 = vlog2.pop %v460
    %v464 = vmul.f32 %v463, 0.6931472
    %v465 = vsub.f32 %v462, %v464
    %v466 = vsel %vm422, 1, 0
    %v467 = vperm.slane %v466, 0
    %vm468 = vcmp.eq.s32.totalorder %v467, 1
    %v469 = vsel %vm468, %v461, %v416
    %v470 = vsel %vm422, %v465, %v417
    %s471 = scalar_lea.vmem %s53, 16
    %v472 = vld [vmem:[%s471] sm:$0xff]
    %s473 = sadd.s32 %s61, 2
    %v474 = vstv %s473
    %vm475 = vcmp.lt.s32.totalorder %v474, %v60
    %v476 = vrot.slane %v472, 4
    %v477 = vmax.f32 %v472, %v476
    %v478 = vrot.slane %v477, 2
    %v479 = vmax.f32 %v477, %v478
    %v480 = vrot.slane %v479, 1
    %v481 = vmax.f32 %v479, %v480
    %v482 = vsub.f32 %v472, %v481
    %v483 = vmul.f32 %v482, 1.442695
    %v484 = vpow.pop %v483
    %485 = vmatpush.msra.mxu0 0.0
    %486 = vmatpush.msra.mxu0 0.0
    %487 = vmatpush.msra.mxu0 0.0
    %488 = vmatpush.msra.mxu0 0.0
    %489 = vmatpush.msra.mxu0 0.0
    %490 = vmatpush.msra.mxu0 0.0
    %491 = vmatpush.msra.mxu0 0.0
    %492 = vmatpush.msra.mxu0 0.0
    %493 = vmatpush.msra.mxu0 0.0
    %494 = vmatpush.msra.mxu0 0.0
    %495 = vmatpush.msra.mxu0 0.0
    %496 = vmatpush.msra.mxu0 0.0
    %497 = vmatpush.msra.mxu0 0.0
    %498 = vmatpush.msra.mxu0 0.0
    %499 = vmatpush.msra.mxu0 0.0
    %500 = vmatpush.msra.mxu0 %v469
    %501 = vmatmul.f32.gmra.mxu0 %v377
    %v502 = vpop.f32.mrf.mxu0
    %v503 = vadd.f32 0.0, %v502
    %504 = vdwg.mxu0
    %v505 = vmul.f32 %v503, %v484
    %v506 = vrot.slane %v505, 4
    %v507 = vmax.f32 %v505, %v506
    %v508 = vrot.slane %v507, 2
    %v509 = vmax.f32 %v507, %v508
    %v510 = vrot.slane %v509, 1
    %v511 = vmax.f32 %v509, %v510
    %v512 = vmax.f32 %v511, 1e-30
    %v513 = vrcp.pop %v512
    %v514 = vmul.f32 %v505, %v513
    %v515 = vadd.f32 %v470, %v481
    %v516 = vlog2.pop %v513
    %v517 = vmul.f32 %v516, 0.6931472
    %v518 = vsub.f32 %v515, %v517
    %v519 = vsel %vm475, 1, 0
    %v520 = vperm.slane %v519, 0
    %vm521 = vcmp.eq.s32.totalorder %v520, 1
    %v522 = vsel %vm521, %v514, %v469
    %v523 = vsel %vm475, %v518, %v470
    %s524 = scalar_lea.vmem %s53, 24
    %v525 = vld [vmem:[%s524] sm:$0xff]
    %s526 = sadd.s32 %s61, 3
    %v527 = vstv %s526
    %vm528 = vcmp.lt.s32.totalorder %v527, %v60
    %v529 = vrot.slane %v525, 4
    %v530 = vmax.f32 %v525, %v529
    %v531 = vrot.slane %v530, 2
    %v532 = vmax.f32 %v530, %v531
    %v533 = vrot.slane %v532, 1
    %v534 = vmax.f32 %v532, %v533
    %v535 = vsub.f32 %v525, %v534
    %v536 = vmul.f32 %v535, 1.442695
    %v537 = vpow.pop %v536
    %538 = vmatpush.msra.mxu0 0.0
    %539 = vmatpush.msra.mxu0 0.0
    %540 = vmatpush.msra.mxu0 0.0
    %541 = vmatpush.msra.mxu0 0.0
    %542 = vmatpush.msra.mxu0 0.0
    %543 = vmatpush.msra.mxu0 0.0
    %544 = vmatpush.msra.mxu0 0.0
    %545 = vmatpush.msra.mxu0 0.0
    %546 = vmatpush.msra.mxu0 0.0
    %547 = vmatpush.msra.mxu0 0.0
    %548 = vmatpush.msra.mxu0 0.0
    %549 = vmatpush.msra.mxu0 0.0
    %550 = vmatpush.msra.mxu0 0.0
    %551 = vmatpush.msra.mxu0 0.0
    %552 = vmatpush.msra.mxu0 0.0
    %553 = vmatpush.msra.mxu0 %v522
    %554 = vmatmul.f32.gmra.mxu0 %v377
    %v555 = vpop.f32.mrf.mxu0
    %v556 = vadd.f32 0.0, %v555
    %557 = vdwg.mxu0
    %v558 = vmul.f32 %v556, %v537
    %v559 = vrot.slane %v558, 4
    %v560 = vmax.f32 %v558, %v559
    %v561 = vrot.slane %v560, 2
    %v562 = vmax.f32 %v560, %v561
    %v563 = vrot.slane %v562, 1
    %v564 = vmax.f32 %v562, %v563
    %v565 = vmax.f32 %v564, 1e-30
    %v566 = vrcp.pop %v565
    %v567 = vmul.f32 %v558, %v566
    %v568 = vadd.f32 %v523, %v534
    %v569 = vlog2.pop %v566
    %v570 = vmul.f32 %v569, 0.6931472
    %v571 = vsub.f32 %v568, %v570
    %v572 = vsel %vm528, 1, 0
    %v573 = vperm.slane %v572, 0
    %vm574 = vcmp.eq.s32.totalorder %v573, 1
    %v575 = vsel %vm574, %v567, %v522
    %v576 = vsel %vm528, %v571, %v523
    %s577 = scalar_lea.vmem %s53, 32
    %v578 = vld [vmem:[%s577] sm:$0xff]
    %s579 = sadd.s32 %s61, 4
    %v580 = vstv %s579
    %vm581 = vcmp.lt.s32.totalorder %v580, %v60
    %v582 = vrot.slane %v578, 4
    %v583 = vmax.f32 %v578, %v582
    %v584 = vrot.slane %v583, 2
    %v585 = vmax.f32 %v583, %v584
    %v586 = vrot.slane %v585, 1
    %v587 = vmax.f32 %v585, %v586
    %v588 = vsub.f32 %v578, %v587
    %v589 = vmul.f32 %v588, 1.442695
    %v590 = vpow.pop %v589
    %591 = vmatpush.msra.mxu0 0.0
    %592 = vmatpush.msra.mxu0 0.0
    %593 = vmatpush.msra.mxu0 0.0
    %594 = vmatpush.msra.mxu0 0.0
    %595 = vmatpush.msra.mxu0 0.0
    %596 = vmatpush.msra.mxu0 0.0
    %597 = vmatpush.msra.mxu0 0.0
    %598 = vmatpush.msra.mxu0 0.0
    %599 = vmatpush.msra.mxu0 0.0
    %600 = vmatpush.msra.mxu0 0.0
    %601 = vmatpush.msra.mxu0 0.0
    %602 = vmatpush.msra.mxu0 0.0
    %603 = vmatpush.msra.mxu0 0.0
    %604 = vmatpush.msra.mxu0 0.0
    %605 = vmatpush.msra.mxu0 0.0
    %606 = vmatpush.msra.mxu0 %v575
    %607 = vmatmul.f32.gmra.mxu0 %v377
    %v608 = vpop.f32.mrf.mxu0
    %v609 = vadd.f32 0.0, %v608
    %610 = vdwg.mxu0
    %v611 = vmul.f32 %v609, %v590
    %v612 = vrot.slane %v611, 4
    %v613 = vmax.f32 %v611, %v612
    %v614 = vrot.slane %v613, 2
    %v615 = vmax.f32 %v613, %v614
    %v616 = vrot.slane %v615, 1
    %v617 = vmax.f32 %v615, %v616
    %v618 = vmax.f32 %v617, 1e-30
    %v619 = vrcp.pop %v618
    %v620 = vmul.f32 %v611, %v619
    %v621 = vadd.f32 %v576, %v587
    %v622 = vlog2.pop %v619
    %v623 = vmul.f32 %v622, 0.6931472
    %v624 = vsub.f32 %v621, %v623
    %v625 = vsel %vm581, 1, 0
    %v626 = vperm.slane %v625, 0
    %vm627 = vcmp.eq.s32.totalorder %v626, 1
    %v628 = vsel %vm627, %v620, %v575
    %v629 = vsel %vm581, %v624, %v576
    %s630 = scalar_lea.vmem %s53, 40
    %v631 = vld [vmem:[%s630] sm:$0xff]
    %s632 = sadd.s32 %s61, 5
    %v633 = vstv %s632
    %vm634 = vcmp.lt.s32.totalorder %v633, %v60
    %v635 = vrot.slane %v631, 4
    %v636 = vmax.f32 %v631, %v635
    %v637 = vrot.slane %v636, 2
    %v638 = vmax.f32 %v636, %v637
    %v639 = vrot.slane %v638, 1
    %v640 = vmax.f32 %v638, %v639
    %v641 = vsub.f32 %v631, %v640
    %v642 = vmul.f32 %v641, 1.442695
    %v643 = vpow.pop %v642
    %644 = vmatpush.msra.mxu0 0.0
    %645 = vmatpush.msra.mxu0 0.0
    %646 = vmatpush.msra.mxu0 0.0
    %647 = vmatpush.msra.mxu0 0.0
    %648 = vmatpush.msra.mxu0 0.0
    %649 = vmatpush.msra.mxu0 0.0
    %650 = vmatpush.msra.mxu0 0.0
    %651 = vmatpush.msra.mxu0 0.0
    %652 = vmatpush.msra.mxu0 0.0
    %653 = vmatpush.msra.mxu0 0.0
    %654 = vmatpush.msra.mxu0 0.0
    %655 = vmatpush.msra.mxu0 0.0
    %656 = vmatpush.msra.mxu0 0.0
    %657 = vmatpush.msra.mxu0 0.0
    %658 = vmatpush.msra.mxu0 0.0
    %659 = vmatpush.msra.mxu0 %v628
    %660 = vmatmul.f32.gmra.mxu0 %v377
    %v661 = vpop.f32.mrf.mxu0
    %v662 = vadd.f32 0.0, %v661
    %663 = vdwg.mxu0
    %v664 = vmul.f32 %v662, %v643
    %v665 = vrot.slane %v664, 4
    %v666 = vmax.f32 %v664, %v665
    %v667 = vrot.slane %v666, 2
    %v668 = vmax.f32 %v666, %v667
    %v669 = vrot.slane %v668, 1
    %v670 = vmax.f32 %v668, %v669
    %v671 = vmax.f32 %v670, 1e-30
    %v672 = vrcp.pop %v671
    %v673 = vmul.f32 %v664, %v672
    %v674 = vadd.f32 %v629, %v640
    %v675 = vlog2.pop %v672
    %v676 = vmul.f32 %v675, 0.6931472
    %v677 = vsub.f32 %v674, %v676
    %v678 = vsel %vm634, 1, 0
    %v679 = vperm.slane %v678, 0
    %vm680 = vcmp.eq.s32.totalorder %v679, 1
    %v681 = vsel %vm680, %v673, %v628
    %v682 = vsel %vm634, %v677, %v629
    %683 = vst [vmem:[#allocation2] sm:$0xff] %v681
    %684 = vst [vmem:[#allocation3] sm:$0x1] %v682
  $region29: #{crf_log_likelihood.1} parent=0 // pred_fallthru
    _
  // Predicated region
  $region30: #{crf_log_likelihood.1} parent=0 // pred_check
    %p685 = pneg %p62
  $region31: #{crf_log_likelihood.1} parent=0 // pred_check_branch
    %687 = sbr.rel (%p685) target = $region33
  $region32: #{crf_log_likelihood.1} parent=0 // pred_region
    %v688 = vld [vmem:[#allocation2] sm:$0xff]
    %v689 = vld [vmem:[%s4] sm:$0xff]
    %691 = vset.pattern.permute.xlu0 0
    %692 = vperm.xlu0 %691, %v689
    %v693 = vpop.permute.xlu0 %692
    %v695 = vmul.f32 %v688, %v693
    %v696 = vrot.slane %v695, 4
    %v697 = vadd.f32 %v695, %v696
    %v698 = vrot.slane %v697, 2
    %v699 = vadd.f32 %v697, %v698
    %v700 = vrot.slane %v699, 1
    %v701 = vadd.f32 %v699, %v700
    %v702 = vld [vmem:[#allocation3] sm:$0x1]
    %v703 = vlog2.pop %v701
    %v704 = vmul.f32 %v703, 0.6931472
    %v705 = vadd.f32 %v702, %v704
    %706 = vst [vmem:[%s6] sm:$0x1] %v705
  $region33: #{crf_log_likelihood.1} parent=0 // pred_fallthru
    _
  // Predicated region
  $region34: #{crf_log_likelihood.1} parent=0 // pred_check
    _
  $region35: #{crf_log_likelihood.1} parent=0 // pred_check_branch
    %708 = sbr.rel (0) target = $region37
  $region36: #{crf_log_likelihood.1} parent=0 // pred_region
    _
  $region37: #{crf_log_likelihood.1} parent=0 // pred_fallthru
    _
  // Predicated region
  $region38: #{crf_log_likelihood.1} parent=0 // pred_check
    _
  $region39: #{crf_log_likelihood.1} parent=0 // pred_check_branch
    %710 = sbr.rel (0) target = $region41
  $region40: #{crf_log_likelihood.1} parent=0 // pred_region
    _
  $region41: #{crf_log_likelihood.1} parent=0 // pred_fallthru
    _

</llo_original>
